<compile_context>
chip_gen: v7x
topology: tpu7x:2x2x1
jax: 0.10.0
libtpu: 0.0.40
codegen_flags: <defaults>
</compile_context>

<pallas_src>
import jax
import jax.numpy as jnp
from jax import lax
from jax.experimental import pallas as pl
from jax.experimental.pallas import tpu as pltpu


def _round_up(x, m):
    return ((x + m - 1) // m) * m


_ROW_TILE_CAP = 512      # multiple of 256 (v6e/v7x MXU); can be raised on v6e (128 MiB VMEM)
_HIDDEN_CHUNK_CAP = 512  # bounds the live (tm, th) f32 intermediate + streamed weight chunks


def _pick_row_tile(m):
    if m > _ROW_TILE_CAP:
        return _ROW_TILE_CAP
    if m > 8:
        # Split into >=2 row steps so v7x's two TensorCores both get work;
        # the ragged last tile is masked by Pallas on the output write.
        return _round_up((m + 1) // 2, 8)
    return m  # tiny: single full-extent tile (always a legal block shape)


def _pick_hidden_chunk(hidden):
    if hidden <= _HIDDEN_CHUNK_CAP:
        return hidden
    # Prefer a 128-multiple chunk that divides hidden exactly, so the reduction
    # over hidden needs no in-kernel masking.
    for th in range(_HIDDEN_CHUNK_CAP, 0, -128):
        if hidden % th == 0:
            return th
    return hidden  # odd hidden size: fall back to fully-resident hidden dim


def _gelu_exact(x):
    """Exact (erf-based) GELU matching torch.nn.GELU() default, f32 math.

    erf via Abramowitz & Stegun 7.1.26 (|err| <= 1.5e-7).  Rewritten as
    gelu(x) = relu(x) - 0.5*|x|*(1 - erf(|x|/sqrt(2))) so no sign/select fixup
    is needed, and the divide runs on the EUP via pl.reciprocal(approx=True).
    """
    inv_sqrt2 = 0.7071067811865476
    za = jnp.abs(x) * inv_sqrt2                        # |x| / sqrt(2)
    t = pl.reciprocal(1.0 + 0.3275911 * za, approx=True)
    poly = ((((1.061405429 * t - 1.453152027) * t + 1.421413741) * t
             - 0.284496736) * t + 0.254829592) * t
    q = poly * jnp.exp(-za * za)                       # 1 - erf(|x|/sqrt(2))
    return jnp.maximum(x, 0.0) - inv_sqrt2 * za * q    # relu(x) - 0.5*|x|*q


def _mlp_kernel(x_ref, w1_ref, b1_ref, w2_ref, b2_ref, out_ref, acc_ref):
    """One (row-tile, hidden-chunk) grid step.

    x_ref : (TM, C_in)     w1_ref: (TH, C_in)    b1_ref: (1, TH)
    w2_ref: (C_out, TH)    b2_ref: (1, C_out)
    out_ref: (TM, C_out)   acc_ref: (TM, C_out) f32 scratch accumulator
    """
    k = pl.program_id(1)

    @pl.when(k == 0)
    def _init():
        acc_ref[...] = jnp.zeros_like(acc_ref)

    # fc1 chunk: x @ W1[k-th chunk].T  — native dtypes in, f32 accumulation.
    h = lax.dot_general(
        x_ref[...], w1_ref[...], (((1,), (1,)), ((), ())),
        preferred_element_type=jnp.float32)
    h = _gelu_exact(h + b1_ref[...].astype(jnp.float32))
    # dropout(p=0.0) -> identity

    # fc2 chunk: accumulate gelu(h) @ W2[:, k-th chunk].T into the f32 scratch.
    acc_ref[...] += lax.dot_general(
        h.astype(w2_ref.dtype), w2_ref[...], (((1,), (1,)), ((), ())),
        preferred_element_type=jnp.float32)

    @pl.when(k == pl.num_programs(1) - 1)
    def _finalize():
        out_ref[...] = (acc_ref[...] + b2_ref[...].astype(jnp.float32)
                        ).astype(out_ref.dtype)
        # dropout(p=0.0) -> identity


def mlp_forward(x, params):
    """x: (..., C_in) -> (..., C_out).

    params use the torch nn.Linear layout: w1 (H, C_in), b1 (H,), w2 (C_out, H),
    b2 (C_out,).  x and weights are assumed to share a dtype (f32 or bf16);
    accumulation is always f32.
    """
    lead_shape = x.shape[:-1]
    c_in = x.shape[-1]
    m = 1
    for d in lead_shape:
        m *= d

    w1 = params["w1"]                 # (H, C_in)  — used as-is, no transpose
    w2 = params["w2"]                 # (C_out, H) — used as-is, no transpose
    b1 = params["b1"].reshape(1, -1)  # (1, H)
    b2 = params["b2"].reshape(1, -1)  # (1, C_out)
    hidden = w1.shape[0]
    c_out = w2.shape[0]

    # Flatten all leading dims into one big row axis -> large MXU-friendly slab.
    x2 = x.reshape(m, c_in)

    tm = _pick_row_tile(m)
    th = _pick_hidden_chunk(hidden)
    grid = (pl.cdiv(m, tm), pl.cdiv(hidden, th))

    # VMEM budget from the actual (padded) tile footprint; explicit so the scoped
    # default (16 MiB v5e / 32 MiB v6e,v7x) never silently constrains the kernel.
    xi = x.dtype.itemsize
    wi = w1.dtype.itemsize

    def _buf(rows, cols, itemsize, nbuf=2):
        return nbuf * _round_up(rows, 8) * _round_up(cols, 128) * itemsize

    est = (_buf(tm, c_in, xi)            # x tile (double-buffered)
           + _buf(th, c_in, wi)          # W1 chunk
           + _buf(1, th, wi)             # b1 chunk
           + _buf(c_out, th, wi)         # W2 chunk
           + _buf(1, c_out, wi)          # b2
           + _buf(tm, c_out, xi)         # out tile
           + _buf(tm, c_out, 4, nbuf=1)  # f32 accumulator scratch
           + _buf(tm, th, 4, nbuf=2))    # live f32 intermediate + temps
    vmem_limit = max(32 * 1024 * 1024,
                     min(int(est * 1.5) + (2 << 20), 128 * 1024 * 1024))

    cost = pl.CostEstimate(
        flops=2 * m * hidden * (c_in + c_out),
        transcendentals=m * hidden,      # one exp (+ one EUP recip) per hidden elem
        bytes_accessed=(x2.size * xi + m * c_out * xi
                        + (w1.size + w2.size + b1.size + b2.size) * wi),
    )

    out = pl.pallas_call(
        _mlp_kernel,
        out_shape=jax.ShapeDtypeStruct((m, c_out), x.dtype),
        grid=grid,
        in_specs=[
            pl.BlockSpec((tm, c_in), lambda i, k: (i, 0)),    # x row tile
            pl.BlockSpec((th, c_in), lambda i, k: (k, 0)),    # W1 hidden chunk
            pl.BlockSpec((1, th), lambda i, k: (0, k)),       # b1 chunk
            pl.BlockSpec((c_out, th), lambda i, k: (0, k)),   # W2 hidden chunk
            pl.BlockSpec((1, c_out), lambda i, k: (0, 0)),    # b2
        ],
        # NOTE: if C_out < 128 the final store is a masked partial vst; padding
        # out-features to 128 would cost an extra wrapper HBM pass, so we accept it.
        out_specs=pl.BlockSpec((tm, c_out), lambda i, k: (i, 0)),
        scratch_shapes=[pltpu.VMEM((tm, c_out), jnp.float32)],
        compiler_params=pltpu.CompilerParams(
            dimension_semantics=("parallel", "arbitrary"),
            vmem_limit_bytes=vmem_limit,
        ),
        cost_estimate=cost,
    )(x2, w1, b1, w2, b2)

    return out.reshape(*lead_shape, c_out)


def mlp_reference(x, params):
    """Pure-JAX transcription of the PyTorch forward (for verification)."""
    h = x @ params["w1"].T + params["b1"]
    h = jax.nn.gelu(h, approximate=False)   # torch nn.GELU() default (exact erf)
    # dropout(p=0.0) is identity
    return h @ params["w2"].T + params["b2"]


if __name__ == "__main__":
    # Small shapes consistent with the module: tokens (B, N, C_in), hidden H.
    B, N = 2, 16
    C_IN, HIDDEN, C_OUT = 32, 64, 32

    key = jax.random.PRNGKey(0)
    k1, k2, k3, k4, k5 = jax.random.split(key, 5)

    # torch nn.Linear convention: weight is (out_features, in_features).
    params = {
        "w1": jax.random.normal(k1, (HIDDEN, C_IN), jnp.float32) * 0.05,
        "b1": jax.random.normal(k2, (HIDDEN,), jnp.float32) * 0.05,
        "w2": jax.random.normal(k3, (C_OUT, HIDDEN), jnp.float32) * 0.05,
        "b2": jax.random.normal(k4, (C_OUT,), jnp.float32) * 0.05,
    }
    x = jax.random.normal(k5, (B, N, C_IN), jnp.float32)

    out = jax.block_until_ready(mlp_forward(x, params))
    ref = mlp_reference(x, params)

    assert out.shape == (B, N, C_OUT), out.shape
    err = float(jnp.max(jnp.abs(out - ref)))
    # Tolerance covers the A&S erf polynomial (<=1.5e-7) and the EUP approximate
    # reciprocal used inside GELU.
    assert err < 1e-3, err
    print("KERNEL_OK")
</pallas_src>

<mosaic_0001>
module attributes {stable_mosaic.version = 11 : i64} {
  func.func @_mlp_kernel(%arg0: i32, %arg1: i32, %arg2: memref<16x32xf32, #tpu.memory_space<vmem>>, %arg3: memref<64x32xf32, #tpu.memory_space<vmem>>, %arg4: memref<1x64xf32, #tpu.memory_space<vmem>>, %arg5: memref<32x64xf32, #tpu.memory_space<vmem>>, %arg6: memref<1x32xf32, #tpu.memory_space<vmem>>, %arg7: memref<16x32xf32, #tpu.memory_space<vmem>>, %arg8: memref<16x32xf32, #tpu.memory_space<vmem>>) attributes {dimension_semantics = [#tpu.dimension_semantics<parallel>, #tpu.dimension_semantics<arbitrary>], iteration_bounds = array<i64: 2, 1>, scalar_prefetch = 0 : i64, scratch_operands = 1 : i64, tpu.core_type = #tpu.core_type<tc>, window_params = [{transform_indices = @transform_0, window_bounds = array<i64: 16, 32>}, {transform_indices = @transform_1, window_bounds = array<i64: 64, 32>}, {transform_indices = @transform_2, window_bounds = array<i64: 1, 64>}, {transform_indices = @transform_3, window_bounds = array<i64: 32, 64>}, {pipeline_mode = #tpu.pipeline_mode<synchronous>, transform_indices = @transform_4, window_bounds = array<i64: 1, 32>}, {transform_indices = @transform_5, window_bounds = array<i64: 16, 32>}]} {
    %c0_i32 = arith.constant 0 : i32
    %0 = arith.cmpi eq, %arg1, %c0_i32 : i32
    %1 = arith.extui %0 : i1 to i32
    %c0_i32_0 = arith.constant 0 : i32
    %2 = arith.cmpi ne, %1, %c0_i32_0 : i32
    scf.if %2 {
      %cst_26 = arith.constant 0.000000e+00 : f32
      %50 = vector.broadcast %cst_26 : f32 to vector<16x32xf32>
      %c0_27 = arith.constant 0 : index
      %c0_28 = arith.constant 0 : index
      %51 = vector.load %arg8[%c0_27, %c0_28] : memref<16x32xf32, #tpu.memory_space<vmem>>, vector<16x32xf32>
      tpu.vector_store %arg8[%c0_27, %c0_28], %50 {strides = array<i32>} : memref<16x32xf32, #tpu.memory_space<vmem>>, vector<16x32xf32>,
    } else {
    }
    %c0 = arith.constant 0 : index
    %c0_1 = arith.constant 0 : index
    %3 = vector.load %arg2[%c0, %c0_1] : memref<16x32xf32, #tpu.memory_space<vmem>>, vector<16x32xf32>
    %c0_2 = arith.constant 0 : index
    %c0_3 = arith.constant 0 : index
    %4 = vector.load %arg3[%c0_2, %c0_3] : memref<64x32xf32, #tpu.memory_space<vmem>>, vector<64x32xf32>
    %cst = arith.constant dense<0.000000e+00> : vector<16x64xf32>
    %5 = tpu.matmul %3, %4, %cst {dimension_numbers = #tpu.dot_dimension_numbers<[1], [1], [0], [0], [0, 0, 1, 0], [], []>} : vector<16x32xf32>, vector<64x32xf32>, vector<16x64xf32> -> vector<16x64xf32>
    %c0_4 = arith.constant 0 : index
    %c0_5 = arith.constant 0 : index
    %6 = vector.load %arg4[%c0_4, %c0_5] : memref<1x64xf32, #tpu.memory_space<vmem>>, vector<1x64xf32>
    %7 = vector.broadcast %6 : vector<1x64xf32> to vector<16x64xf32>
    %8 = arith.addf %5, %7 : vector<16x64xf32>
    %9 = math.absf %8 : vector<16x64xf32>
    %cst_6 = arith.constant 0.707106769 : f32
    %10 = vector.broadcast %cst_6 : f32 to vector<16x64xf32>
    %11 = arith.mulf %9, %10 : vector<16x64xf32>
    %cst_7 = arith.constant 0.327591091 : f32
    %12 = vector.broadcast %cst_7 : f32 to vector<16x64xf32>
    %13 = arith.mulf %12, %11 : vector<16x64xf32>
    %cst_8 = arith.constant 1.000000e+00 : f32
    %14 = vector.broadcast %cst_8 : f32 to vector<16x64xf32>
    %15 = arith.addf %14, %13 : vector<16x64xf32>
    %16 = tpu.reciprocal %15 {approx = true} : vector<16x64xf32> -> vector<16x64xf32>
    %cst_9 = arith.constant 1.06140542 : f32
    %17 = vector.broadcast %cst_9 : f32 to vector<16x64xf32>
    %18 = arith.mulf %17, %16 : vector<16x64xf32>
    %cst_10 = arith.constant 1.45315206 : f32
    %19 = vector.broadcast %cst_10 : f32 to vector<16x64xf32>
    %20 = arith.subf %18, %19 : vector<16x64xf32>
    %21 = arith.mulf %20, %16 : vector<16x64xf32>
    %cst_11 = arith.constant 1.42141378 : f32
    %22 = vector.broadcast %cst_11 : f32 to vector<16x64xf32>
    %23 = arith.addf %21, %22 : vector<16x64xf32>
    %24 = arith.mulf %23, %16 : vector<16x64xf32>
    %cst_12 = arith.constant 0.284496725 : f32
    %25 = vector.broadcast %cst_12 : f32 to vector<16x64xf32>
    %26 = arith.subf %24, %25 : vector<16x64xf32>
    %27 = arith.mulf %26, %16 : vector<16x64xf32>
    %cst_13 = arith.constant 0.254829586 : f32
    %28 = vector.broadcast %cst_13 : f32 to vector<16x64xf32>
    %29 = arith.addf %27, %28 : vector<16x64xf32>
    %30 = arith.mulf %29, %16 : vector<16x64xf32>
    %cst_14 = arith.constant 0.000000e+00 : f32
    %31 = vector.broadcast %cst_14 : f32 to vector<16x64xf32>
    %32 = arith.subf %31, %11 : vector<16x64xf32>
    %33 = arith.mulf %32, %11 : vector<16x64xf32>
    %34 = math.exp %33 : vector<16x64xf32>
    %35 = arith.mulf %30, %34 : vector<16x64xf32>
    %cst_15 = arith.constant 0.000000e+00 : f32
    %36 = vector.broadcast %cst_15 : f32 to vector<16x64xf32>
    %37 = arith.maximumf %8, %36 : vector<16x64xf32>
    %cst_16 = arith.constant 0.707106769 : f32
    %38 = vector.broadcast %cst_16 : f32 to vector<16x64xf32>
    %39 = arith.mulf %38, %11 : vector<16x64xf32>
    %40 = arith.mulf %39, %35 : vector<16x64xf32>
    %41 = arith.subf %37, %40 : vector<16x64xf32>
    %c0_17 = arith.constant 0 : index
    %c0_18 = arith.constant 0 : index
    %42 = vector.load %arg8[%c0_17, %c0_18] : memref<16x32xf32, #tpu.memory_space<vmem>>, vector<16x32xf32>
    %c0_19 = arith.constant 0 : index
    %c0_20 = arith.constant 0 : index
    %43 = vector.load %arg5[%c0_19, %c0_20] : memref<32x64xf32, #tpu.memory_space<vmem>>, vector<32x64xf32>
    %cst_21 = arith.constant dense<0.000000e+00> : vector<16x32xf32>
    %44 = tpu.matmul %41, %43, %cst_21 {dimension_numbers = #tpu.dot_dimension_numbers<[1], [1], [0], [0], [0, 0, 1, 0], [], []>} : vector<16x64xf32>, vector<32x64xf32>, vector<16x32xf32> -> vector<16x32xf32>
    %45 = arith.addf %42, %44 : vector<16x32xf32>
    %c0_22 = arith.constant 0 : index
    %c0_23 = arith.constant 0 : index
    %46 = vector.load %arg8[%c0_22, %c0_23] : memref<16x32xf32, #tpu.memory_space<vmem>>, vector<16x32xf32>
    tpu.vector_store %arg8[%c0_22, %c0_23], %45 {strides = array<i32>} : memref<16x32xf32, #tpu.memory_space<vmem>>, vector<16x32xf32>,
    %c0_i32_24 = arith.constant 0 : i32
    %47 = arith.cmpi eq, %arg1, %c0_i32_24 : i32
    %48 = arith.extui %47 : i1 to i32
    %c0_i32_25 = arith.constant 0 : i32
    %49 = arith.cmpi ne, %48, %c0_i32_25 : i32
    scf.if %49 {
      %c0_26 = arith.constant 0 : index
      %c0_27 = arith.constant 0 : index
      %50 = vector.load %arg8[%c0_26, %c0_27] : memref<16x32xf32, #tpu.memory_space<vmem>>, vector<16x32xf32>
      %c0_28 = arith.constant 0 : index
      %c0_29 = arith.constant 0 : index
      %51 = vector.load %arg6[%c0_28, %c0_29] : memref<1x32xf32, #tpu.memory_space<vmem>>, vector<1x32xf32>
      %52 = vector.broadcast %51 : vector<1x32xf32> to vector<16x32xf32>
      %53 = arith.addf %50, %52 : vector<16x32xf32>
      %c0_30 = arith.constant 0 : index
      %c0_31 = arith.constant 0 : index
      %54 = vector.load %arg7[%c0_30, %c0_31] : memref<16x32xf32, #tpu.memory_space<vmem>>, vector<16x32xf32>
      tpu.vector_store %arg7[%c0_30, %c0_31], %53 {strides = array<i32>} : memref<16x32xf32, #tpu.memory_space<vmem>>, vector<16x32xf32>,
    } else {
    }
    return
  }
  func.func @transform_0(%arg0: i32, %arg1: i32) -> (i32, i32) {
    %c0_i32 = arith.constant 0 : i32
    %c0_i32_0 = arith.constant 0 : i32
    return %arg0, %c0_i32 : i32, i32
  }
  func.func @transform_1(%arg0: i32, %arg1: i32) -> (i32, i32) {
    %c0_i32 = arith.constant 0 : i32
    %c0_i32_0 = arith.constant 0 : i32
    return %arg1, %c0_i32 : i32, i32
  }
  func.func @transform_2(%arg0: i32, %arg1: i32) -> (i32, i32) {
    %c0_i32 = arith.constant 0 : i32
    %c0_i32_0 = arith.constant 0 : i32
    return %c0_i32, %arg1 : i32, i32
  }
  func.func @transform_3(%arg0: i32, %arg1: i32) -> (i32, i32) {
    %c0_i32 = arith.constant 0 : i32
    %c0_i32_0 = arith.constant 0 : i32
    return %c0_i32, %arg1 : i32, i32
  }
  func.func @transform_4(%arg0: i32, %arg1: i32) -> (i32, i32) {
    %c0_i32 = arith.constant 0 : i32
    %c0_i32_0 = arith.constant 0 : i32
    %c0_i32_1 = arith.constant 0 : i32
    return %c0_i32, %c0_i32_0 : i32, i32
  }
  func.func @transform_5(%arg0: i32, %arg1: i32) -> (i32, i32) {
    %c0_i32 = arith.constant 0 : i32
    %c0_i32_0 = arith.constant 0 : i32
    return %arg0, %c0_i32 : i32, i32
  }
}

</mosaic_0001>

<llo_original>
// kernel: tpu_custom_call.1
$region0: #{tpu_custom_call.1}
  #allocation0 [shape = 'u32[]', space=smem, size = 0x4, offset = 0x4, fixed_abs, tag = 'smem constant byte address 0x4 - core index']
  #allocation1 [shape = 'u32[144,128]{1,0:T(1,128)}', space=vmem, size = 0x12000, scoped, tag = 'internal scratch']
  #allocation2 [shape = 'f32[16,32]{1,0:T(8,128)}', space=vmem, size = 0x2000, scoped, tag = 'scratch operand']
  %s0 = inlined_call_operand.vmem [shape: f32[32,32], index: 0, kind: input, shape index: {}]
  %s1 = inlined_call_operand.vmem [shape: f32[64,32], index: 1, kind: input, shape index: {}]
  %s2 = inlined_call_operand.vmem [shape: f32[1,64], index: 2, kind: input, shape index: {}]
  %s3 = inlined_call_operand.vmem [shape: f32[32,64], index: 3, kind: input, shape index: {}]
  %s4 = inlined_call_operand.vmem [shape: f32[1,32], index: 4, kind: input, shape index: {}]
  %s5 = inlined_call_operand.hbm [shape: f32[32,32], index: 5, kind: output, shape index: {}]
  %s6 = sld [smem:[#allocation0]]
  $region61: #{tpu_custom_call.1} parent=0
    _
  %s8 = ssub.s32 1, %s6
  %s9 = scalar_select 0, %s8, %s6
  $region1: #{tpu_custom_call.1} parent=0
    #allocation3 [shape = 'u8[16384]{0}', space=vmem, size = 0x4000, scoped, tag = 'output window, operand 0']
    #allocation4 [shape = 's32[2]{0}', space=sflag, size = 0x8, scoped, tag = 'scoped memory for tpu_custom_call.1']
    %10 = vsyncpa [#allocation4], 0
    %s11 = scalar_lea.sflag [#allocation4], 1
    %12 = vsyncpa %s11, 0
    loop: start=0, step=1, limit=4
    $region2: #{tpu_custom_call.1} parent=1 // loop_pre_header
      _
    $region3: #{tpu_custom_call.1} parent=1 // loop_header
      %s14 = sphi 0, %s18
      %p15 = scmp.ge.s32.totalorder %s14, 4
      %s21 = sphi 0, %s33
      %s22 = sphi 0, %s29
      %s23 = sphi 0, %s21
      %s24 = sphi 0, %s22
      %s25 = sphi 0, %s23
      %s26 = sphi 0, %s24
      %s36 = sphi 0, %s38
      %s39 = sphi 0, %s36
      %s40 = sphi 0, %s39
      %s56 = sphi 0, %s40
      %s62 = sphi 0, %s64
      %s65 = sphi 0, %s62
      %s66 = sphi 0, %s65
      %s82 = sphi 0, %s66
      %s88 = sphi 0, %s90
      %s91 = sphi 0, %s88
      %s92 = sphi 0, %s91
      %s108 = sphi 0, %s92
      %s114 = sphi 0, %s116
      %s117 = sphi 0, %s114
      %s118 = sphi 0, %s117
      %s134 = sphi 0, %s118
      %s138 = sphi 0, %s138
      %s140 = sphi 0, %s138
      %s141 = sphi 0, %s140
      %s155 = sphi 0, %s141
      %s161 = sphi 0, %s163
      %s164 = sphi 0, %s161
      %s165 = sphi 0, %s164
      %s181 = sphi 0, %s165
    $region4: #{tpu_custom_call.1} parent=1 // loop_header_branch
      %17 = sbr.rel (%p15) target = $region8
    $region5: #{tpu_custom_call.1} parent=1 // loop_body
      %s19 = ssub.s32 %s14, 1
      %s20 = ssub.s32 %s14, 2
      %s27 = sadd.s32 1, %s22
      %p28 = scmp.ge.s32.totalorder %s27, 1
      %s29 = scalar_select %p28, 0, %s27
      %s30 = sadd.s32 1, %s21
      %s31 = scalar_select %p28, %s30, %s21
      %p32 = scmp.ge.s32.totalorder %s31, 2
      %s33 = scalar_select %p32, 0, %s31
      %s34 = ssub.s32 %s21, %s33
      %p35 = scmp.eq.s32.totalorder %s34, 0
      %s37 = sadd.s32 %s36, 1
      %s38 = scalar_select %p35, %s36, %s37
      %p41 = pneg %p35
      %p42 = scmp.eq.s32.totalorder %s14, 1
      %p43 = por %p41, %p42
      %p44 = scmp.ne.s32.totalorder %s36, %s39
      %p45 = scmp.eq.s32.totalorder %s14, 0
      %p46 = por %p44, %p45
      %p47 = scmp.ne.s32.totalorder %s36, %s39
      %p48 = scmp.eq.s32.totalorder %s19, 1
      %p49 = por %p47, %p48
      %p50 = scmp.ne.s32.totalorder %s39, %s40
      %p51 = scmp.eq.s32.totalorder %s19, 0
      %p52 = por %p50, %p51
      %p53 = scmp.ne.s32.totalorder %s39, %s40
      %p54 = scmp.eq.s32.totalorder %s20, 1
      %p55 = por %p53, %p54
      %p57 = scmp.ne.s32.totalorder %s40, %s56
      %p58 = scmp.eq.s32.totalorder %s20, 0
      %p59 = por %p57, %p58
      %s60 = ssub.s32 %s22, %s29
      %p61 = scmp.eq.s32.totalorder %s60, 0
      %s63 = sadd.s32 %s62, 1
      %s64 = scalar_select %p61, %s62, %s63
      %p67 = pneg %p61
      %p68 = scmp.eq.s32.totalorder %s14, 1
      %p69 = por %p67, %p68
      %p70 = scmp.ne.s32.totalorder %s62, %s65
      %p71 = scmp.eq.s32.totalorder %s14, 0
      %p72 = por %p70, %p71
      %p73 = scmp.ne.s32.totalorder %s62, %s65
      %p74 = scmp.eq.s32.totalorder %s19, 1
      %p75 = por %p73, %p74
      %p76 = scmp.ne.s32.totalorder %s65, %s66
      %p77 = scmp.eq.s32.totalorder %s19, 0
      %p78 = por %p76, %p77
      %p79 = scmp.ne.s32.totalorder %s65, %s66
      %p80 = scmp.eq.s32.totalorder %s20, 1
      %p81 = por %p79, %p80
      %p83 = scmp.ne.s32.totalorder %s66, %s82
      %p84 = scmp.eq.s32.totalorder %s20, 0
      %p85 = por %p83, %p84
      %s86 = ssub.s32 %s22, %s29
      %p87 = scmp.eq.s32.totalorder %s86, 0
      %s89 = sadd.s32 %s88, 1
      %s90 = scalar_select %p87, %s88, %s89
      %p93 = pneg %p87
      %p94 = scmp.eq.s32.totalorder %s14, 1
      %p95 = por %p93, %p94
      %p96 = scmp.ne.s32.totalorder %s88, %s91
      %p97 = scmp.eq.s32.totalorder %s14, 0
      %p98 = por %p96, %p97
      %p99 = scmp.ne.s32.totalorder %s88, %s91
      %p100 = scmp.eq.s32.totalorder %s19, 1
      %p101 = por %p99, %p100
      %p102 = scmp.ne.s32.totalorder %s91, %s92
      %p103 = scmp.eq.s32.totalorder %s19, 0
      %p104 = por %p102, %p103
      %p105 = scmp.ne.s32.totalorder %s91, %s92
      %p106 = scmp.eq.s32.totalorder %s20, 1
      %p107 = por %p105, %p106
      %p109 = scmp.ne.s32.totalorder %s92, %s108
      %p110 = scmp.eq.s32.totalorder %s20, 0
      %p111 = por %p109, %p110
      %s112 = ssub.s32 %s22, %s29
      %p113 = scmp.eq.s32.totalorder %s112, 0
      %s115 = sadd.s32 %s114, 1
      %s116 = scalar_select %p113, %s114, %s115
      %p119 = pneg %p113
      %p120 = scmp.eq.s32.totalorder %s14, 1
      %p121 = por %p119, %p120
      %p122 = scmp.ne.s32.totalorder %s114, %s117
      %p123 = scmp.eq.s32.totalorder %s14, 0
      %p124 = por %p122, %p123
      %p125 = scmp.ne.s32.totalorder %s114, %s117
      %p126 = scmp.eq.s32.totalorder %s19, 1
      %p127 = por %p125, %p126
      %p128 = scmp.ne.s32.totalorder %s117, %s118
      %p129 = scmp.eq.s32.totalorder %s19, 0
      %p130 = por %p128, %p129
      %p131 = scmp.ne.s32.totalorder %s117, %s118
      %p132 = scmp.eq.s32.totalorder %s20, 1
      %p133 = por %p131, %p132
      %p135 = scmp.ne.s32.totalorder %s118, %s134
      %p136 = scmp.eq.s32.totalorder %s20, 0
      %p137 = por %p135, %p136
      %s139 = sadd.s32 %s138, 1
      %p142 = scmp.eq.s32.totalorder %s14, 1
      %p143 = scmp.ne.s32.totalorder %s138, %s140
      %p144 = scmp.eq.s32.totalorder %s14, 0
      %p145 = por %p143, %p144
      %p146 = scmp.ne.s32.totalorder %s138, %s140
      %p147 = scmp.eq.s32.totalorder %s19, 1
      %p148 = por %p146, %p147
      %p149 = scmp.ne.s32.totalorder %s140, %s141
      %p150 = scmp.eq.s32.totalorder %s19, 0
      %p151 = por %p149, %p150
      %p152 = scmp.ne.s32.totalorder %s140, %s141
      %p153 = scmp.eq.s32.totalorder %s20, 1
      %p154 = por %p152, %p153
      %p156 = scmp.ne.s32.totalorder %s141, %s155
      %p157 = scmp.eq.s32.totalorder %s20, 0
      %p158 = por %p156, %p157
      %s159 = ssub.s32 %s21, %s33
      %p160 = scmp.eq.s32.totalorder %s159, 0
      %s162 = sadd.s32 %s161, 1
      %s163 = scalar_select %p160, %s161, %s162
      %p166 = pneg %p160
      %p167 = scmp.eq.s32.totalorder %s14, 1
      %p168 = por %p166, %p167
      %p169 = scmp.ne.s32.totalorder %s161, %s164
      %p170 = scmp.eq.s32.totalorder %s14, 0
      %p171 = por %p169, %p170
      %p172 = scmp.ne.s32.totalorder %s161, %s164
      %p173 = scmp.eq.s32.totalorder %s19, 1
      %p174 = por %p172, %p173
      %p175 = scmp.ne.s32.totalorder %s164, %s165
      %p176 = scmp.eq.s32.totalorder %s19, 0
      %p177 = por %p175, %p176
      %p178 = scmp.ne.s32.totalorder %s164, %s165
      %p179 = scmp.eq.s32.totalorder %s20, 1
      %p180 = por %p178, %p179
      %p182 = scmp.ne.s32.totalorder %s165, %s181
      %p183 = scmp.eq.s32.totalorder %s20, 0
      %p184 = por %p182, %p183
      %p185 = scmp.le.s32.totalorder 1, %s14
      %p186 = scmp.lt.s32.totalorder %s14, 3
      %p187 = pnand %p185, %p186
      %p188 = pneg %p187
      // Predicated region
      $region9: #{tpu_custom_call.1} parent=5 // pred_check
        _
      $region10: #{tpu_custom_call.1} parent=5 // pred_check_branch
        %190 = sbr.rel (%p187) target = $region12
      $region11: #{tpu_custom_call.1} parent=5 // pred_region
        %s191 = ssub.s32 %s14, 1
        // Predicated region
        $region13: #{tpu_custom_call.1} parent=11 // pred_check
          %p192 = pneg %p78
        $region14: #{tpu_custom_call.1} parent=11 // pred_check_branch
          %194 = sbr.rel (%p192) target = $region16
        $region15: #{tpu_custom_call.1} parent=11 // pred_region
          %s195 = smul.u32 8, %s24
          %p196 = scmp.lt.s32.totalorder %s195, 7
          %s197 = scalar_select %p196, %s195, 7
          %s198 = smul.addr %s197, 8
          %s199 = scalar_lea.vmem %s1, %s198
          %s200 = smul.u32 8, %s24
        $region16: #{tpu_custom_call.1} parent=11 // pred_fallthru
          _
        // Predicated region
        $region17: #{tpu_custom_call.1} parent=11 // pred_check
          %p201 = pneg %p104
        $region18: #{tpu_custom_call.1} parent=11 // pred_check_branch
          %203 = sbr.rel (%p201) target = $region20
        $region19: #{tpu_custom_call.1} parent=11 // pred_region
          %p204 = scmp.lt.s32.totalorder %s24, 0
          %s205 = scalar_select %p204, %s24, 0
          %s206 = scalar_lea.vmem %s2, %s205
        $region20: #{tpu_custom_call.1} parent=11 // pred_fallthru
          _
        // Predicated region
        $region21: #{tpu_custom_call.1} parent=11 // pred_check
          %p207 = pneg %p130
        $region22: #{tpu_custom_call.1} parent=11 // pred_check_branch
          %209 = sbr.rel (%p207) target = $region24
        $region23: #{tpu_custom_call.1} parent=11 // pred_region
          %p210 = scmp.lt.s32.totalorder %s24, 0
          %s211 = scalar_select %p210, %s24, 0
          %s212 = smul.addr %s211, 8
          %s213 = scalar_lea.vmem %s3, %s212
        $region24: #{tpu_custom_call.1} parent=11 // pred_fallthru
          _
        // Predicated region
        $region25: #{tpu_custom_call.1} parent=11 // pred_check
          %p214 = pneg %p151
        $region26: #{tpu_custom_call.1} parent=11 // pred_check_branch
          %216 = sbr.rel (%p214) target = $region28
        $region27: #{tpu_custom_call.1} parent=11 // pred_region
          _
        $region28: #{tpu_custom_call.1} parent=11 // pred_fallthru
          _
      $region12: #{tpu_custom_call.1} parent=5 // pred_fallthru
        _
      %p217 = scmp.lt.s32.totalorder %s14, 2
      // Predicated region
      $region29: #{tpu_custom_call.1} parent=5 // pred_check
        %p218 = pneg %p217
      $region30: #{tpu_custom_call.1} parent=5 // pred_check_branch
        %220 = sbr.rel (%p218) target = $region32
      $region31: #{tpu_custom_call.1} parent=5 // pred_region
        // Predicated region
        $region33: #{tpu_custom_call.1} parent=31 // pred_check
          %p221 = pneg %p46
        $region34: #{tpu_custom_call.1} parent=31 // pred_check_branch
          %223 = sbr.rel (%p221) target = $region36
        $region35: #{tpu_custom_call.1} parent=31 // pred_region
          %s224 = smul.u32 2, %s21
          %p225 = scmp.lt.s32.totalorder %s224, 3
          %s226 = scalar_select %p225, %s224, 3
          %s227 = smul.addr %s226, 8
          %s228 = scalar_lea.vmem %s0, %s227
          %s229 = smul.u32 2, %s21
        $region36: #{tpu_custom_call.1} parent=31 // pred_fallthru
          _
      $region32: #{tpu_custom_call.1} parent=5 // pred_fallthru
        _
      %p230 = scmp.le.s32.totalorder 1, %s14
      %p231 = scmp.lt.s32.totalorder %s14, 3
      %p232 = pnand %p230, %p231
      %p233 = pneg %p232
      // Predicated region
      $region37: #{tpu_custom_call.1} parent=5 // pred_check
        _
      $region38: #{tpu_custom_call.1} parent=5 // pred_check_branch
        %235 = sbr.rel (%p232) target = $region40
      $region39: #{tpu_custom_call.1} parent=5 // pred_region
        %s236 = ssub.s32 %s14, 1
        %s237 = smul.u32 2, %s23
        %p238 = scmp.lt.s32.totalorder %s237, 3
        %s239 = scalar_select %p238, %s237, 3
        %s240 = smul.addr %s239, 8
        %s241 = scalar_lea.vmem %s0, %s240
        %p242 = pneg %p52
        %p243 = pneg %p49
        %s244 = smul.u32 8, %s24
        %p245 = scmp.lt.s32.totalorder %s244, 7
        %s246 = scalar_select %p245, %s244, 7
        %s247 = smul.addr %s246, 8
        %s248 = scalar_lea.vmem %s1, %s247
        %p249 = pneg %p78
        %p250 = pneg %p75
        %p251 = scmp.lt.s32.totalorder %s24, 0
        %s252 = scalar_select %p251, %s24, 0
        %s253 = scalar_lea.vmem %s2, %s252
        %p254 = pneg %p104
        %p255 = pneg %p101
        %p256 = scmp.lt.s32.totalorder %s24, 0
        %s257 = scalar_select %p256, %s24, 0
        %s258 = smul.addr %s257, 8
        %s259 = scalar_lea.vmem %s3, %s258
        %p260 = pneg %p130
        %p261 = pneg %p127
        %p262 = pneg %p151
        %p263 = pneg %p148
        %p264 = pneg %p177
        %p265 = pneg %p174
        %s266 = sand.u32 %s164, 1
        %s267 = scalar_lea.sflag [#allocation4], %s266
        %s268 = sand.u32 %s164, 1
        %s269 = smul.addr %s268, 16
        %s270 = scalar_lea.vmem [#allocation3], %s269
        %s271 = smul.u32 2, %s23
        %p272 = scmp.lt.s32.totalorder %s271, 3
        %s273 = scalar_select %p272, %s271, 3
        %s274 = smul.addr %s273, 8
        %s275 = scalar_lea.vmem %s0, %s274
        %s276 = smul.u32 2, %s23
        %s277 = smul.u32 8, %s24
        %p278 = scmp.lt.s32.totalorder %s277, 7
        %s279 = scalar_select %p278, %s277, 7
        %s280 = smul.addr %s279, 8
        %s281 = scalar_lea.vmem %s1, %s280
        %s282 = smul.u32 8, %s24
        %p283 = scmp.lt.s32.totalorder %s24, 0
        %s284 = scalar_select %p283, %s24, 0
        %s285 = scalar_lea.vmem %s2, %s284
        %p286 = scmp.lt.s32.totalorder %s24, 0
        %s287 = scalar_select %p286, %s24, 0
        %s288 = smul.addr %s287, 8
        %s289 = scalar_lea.vmem %s3, %s288
        %s290 = smul.u32 2, %s23
        %p291 = scmp.eq.s32.totalorder %s24, 0
        // Predicated region
        $region41: #{tpu_custom_call.1} parent=39 // pred_check
          %p292 = pneg %p291
        $region42: #{tpu_custom_call.1} parent=39 // pred_check_branch
          %294 = sbr.rel (%p292) target = $region44
        $region43: #{tpu_custom_call.1} parent=39 // pred_region
          %vm295 = vcmask 261120
          %296 = vst.msk [vmem:[#allocation2] sm:$0xff] %vm295, 0.0
          %297 = vst.msk [vmem:[#allocation2 + $0x8] sm:$0xff] %vm295, 0.0
        $region44: #{tpu_custom_call.1} parent=39 // pred_fallthru
          _
        %v298 = vld [vmem:[%s275] sm:$0xff]
        %v299 = vld [vmem:[%s275 + $0x8] sm:$0xff]
        %v300 = vld [vmem:[%s281] sm:$0xff]
        %v301 = vld [vmem:[%s281 + $0x8] sm:$0xff]
        %v302 = vld [vmem:[%s281 + $0x10] sm:$0xff]
        %v303 = vld [vmem:[%s281 + $0x18] sm:$0xff]
        %v304 = vld [vmem:[%s281 + $0x20] sm:$0xff]
        %v305 = vld [vmem:[%s281 + $0x28] sm:$0xff]
        %v306 = vld [vmem:[%s281 + $0x30] sm:$0xff]
        %v307 = vld [vmem:[%s281 + $0x38] sm:$0xff]
        %v308 = vld [vmem:[%s285] sm:$0x1]
        %v310 = vlaneseq
        %v311 = vshrl.u32 %v310, 7
        %v312 = vsub.s32 0, %v311
        %v313 = vrot.slane %v308, %v312
        %vm315 = vcmask 261120
        %v317 = vsel %vm315, %v298, 0
        %v320 = vsel %vm315, %v299, 0
        %v323 = vsel %vm315, %v300, 0
        %v326 = vsel %vm315, %v301, 0
        %v329 = vsel %vm315, %v302, 0
        %v332 = vsel %vm315, %v303, 0
        %v335 = vsel %vm315, %v304, 0
        %v338 = vsel %vm315, %v305, 0
        %v341 = vsel %vm315, %v306, 0
        %v344 = vsel %vm315, %v307, 0
        %346 = vmatprep.subr.mxu0 0.0
        %347 = vmatpush1.xpose.msra.mxu0 %v323
        %348 = vmatprep.subr.mxu0 0.0
        %349 = vmatpush1.xpose.msra.mxu0 %v326
        %350 = vmatprep.subr.mxu0 0.0
        %351 = vmatpush1.xpose.msra.mxu0 %v329
        %352 = vmatprep.subr.mxu0 0.0
        %353 = vmatpush1.xpose.msra.mxu0 %v332
        %354 = vmatprep.subr.mxu0 0.0
        %355 = vmatpush1.xpose.msra.mxu0 %v335
        %356 = vmatprep.subr.mxu0 0.0
        %357 = vmatpush1.xpose.msra.mxu0 %v338
        %358 = vmatprep.subr.mxu0 0.0
        %359 = vmatpush1.xpose.msra.mxu0 %v341
        %360 = vmatprep.subr.mxu0 0.0
        %361 = vmatpush1.xpose.msra.mxu0 %v344
        %362 = vmatprep.subr.mxu0 0.0
        %363 = vmatpush1.xpose.msra.mxu0 0.0
        %364 = vmatprep.subr.mxu0 0.0
        %365 = vmatpush1.xpose.msra.mxu0 0.0
        %366 = vmatprep.subr.mxu0 0.0
        %367 = vmatpush1.xpose.msra.mxu0 0.0
        %368 = vmatprep.subr.mxu0 0.0
        %369 = vmatpush1.xpose.msra.mxu0 0.0
        %370 = vmatprep.subr.mxu0 0.0
        %371 = vmatpush1.xpose.msra.mxu0 0.0
        %372 = vmatprep.subr.mxu0 0.0
        %373 = vmatpush1.xpose.msra.mxu0 0.0
        %374 = vmatprep.subr.mxu0 0.0
        %375 = vmatpush1.xpose.msra.mxu0 0.0
        %376 = vmatprep.subr.mxu0 0.0
        %377 = vmatpush1.xpose.msra.mxu0 0.0
        %378 = vmatprep.subr.mxu0 0.0
        %379 = vmatpush1.xpose.msra.mxu0 0.0
        %380 = vmatprep.subr.mxu0 0.0
        %381 = vmatpush1.xpose.msra.mxu0 0.0
        %382 = vmatprep.subr.mxu0 0.0
        %383 = vmatpush1.xpose.msra.mxu0 0.0
        %384 = vmatprep.subr.mxu0 0.0
        %385 = vmatpush1.xpose.msra.mxu0 0.0
        %386 = vmatprep.subr.mxu0 0.0
        %387 = vmatpush1.xpose.msra.mxu0 0.0
        %388 = vmatprep.subr.mxu0 0.0
        %389 = vmatpush1.xpose.msra.mxu0 0.0
        %390 = vmatprep.subr.mxu0 0.0
        %391 = vmatpush1.xpose.msra.mxu0 0.0
        %392 = vmatprep.subr.mxu0 0.0
        %393 = vmatpush1.xpose.msra.mxu0 0.0
        %394 = vmatprep.subr.mxu0 0.0
        %395 = vmatpush1.xpose.msra.mxu0 0.0
        %396 = vmatprep.subr.mxu0 0.0
        %397 = vmatpush1.xpose.msra.mxu0 0.0
        %398 = vmatprep.subr.mxu0 0.0
        %399 = vmatpush1.xpose.msra.mxu0 0.0
        %400 = vmatprep.subr.mxu0 0.0
        %401 = vmatpush1.xpose.msra.mxu0 0.0
        %402 = vmatprep.subr.mxu0 0.0
        %403 = vmatpush1.xpose.msra.mxu0 0.0
        %404 = vmatprep.subr.mxu0 0.0
        %405 = vmatpush1.xpose.msra.mxu0 0.0
        %406 = vmatprep.subr.mxu0 0.0
        %407 = vmatpush1.xpose.msra.mxu0 0.0
        %408 = vmatprep.subr.mxu0 0.0
        %409 = vmatpush1.xpose.msra.mxu0 0.0
        %410 = vmatprep.mubr.f32.mxu0 0.0
        %411 = vmatmul.mubr.f32.gmra.mrb[0].mxu0 %v317
        %v412 = vpop.f32.mrb[0].mxu0
        %v413 = vadd.f32 %v313, %v412
        %v414 = vpop.f32.mrb[0].mxu0
        %415 = vmatprep.mubr.f32.mxu0 0.0
        %416 = vmatmul.mubr.f32.gmra.mrb[0].mxu0 %v320
        %v417 = vpop.f32.mrb[0].mxu0
        %v418 = vadd.f32 %v313, %v417
        %v419 = vpop.f32.mrb[0].mxu0
        %420 = vdwg.mxu0
        %v421 = vand.u32 2147483647, %v413
        %v422 = vand.u32 2147483647, %v418
        %v423 = vmul.f32 %v421, 0.70710677
        %v424 = vmul.f32 %v422, 0.70710677
        %v425 = vmul.f32 %v423, 0.3275911
        %v426 = vmul.f32 %v424, 0.3275911
        %v427 = vadd.f32 %v425, 1.0
        %v428 = vadd.f32 %v426, 1.0
        %v429 = vrcp.pop %v427
        %v430 = vrcp.pop %v428
        %v431 = vmul.f32 %v429, 1.0614054
        %v432 = vmul.f32 %v430, 1.0614054
        %v433 = vsub.f32 %v431, 1.4531521
        %v434 = vsub.f32 %v432, 1.4531521
        %v435 = vmul.f32 %v433, %v429
        %v436 = vmul.f32 %v434, %v430
        %v437 = vadd.f32 %v435, 1.4214138
        %v438 = vadd.f32 %v436, 1.4214138
        %v439 = vmul.f32 %v437, %v429
        %v440 = vmul.f32 %v438, %v430
        %v441 = vsub.f32 %v439, 0.28449672
        %v442 = vsub.f32 %v440, 0.28449672
        %v443 = vmul.f32 %v441, %v429
        %v444 = vmul.f32 %v442, %v430
        %v445 = vadd.f32 %v443, 0.2548296
        %v446 = vadd.f32 %v444, 0.2548296
        %v447 = vmul.f32 %v445, %v429
        %v448 = vmul.f32 %v446, %v430
        %v449 = vsub.f32 0.0, %v423
        %v450 = vsub.f32 0.0, %v424
        %v451 = vmul.f32 %v449, %v423
        %v452 = vmul.f32 %v450, %v424
        %v453 = vmul.f32 %v451, 1.442695
        %v454 = vpow.pop %v453
        %v455 = vmul.f32 %v452, 1.442695
        %v456 = vpow.pop %v455
        %v457 = vmul.f32 %v447, %v454
        %v458 = vmul.f32 %v448, %v456
        %v459 = vmax.f32 %v413, 0.0
        %v460 = vmax.f32 %v418, 0.0
        %v461 = vmul.f32 %v423, 0.70710677
        %v462 = vmul.f32 %v424, 0.70710677
        %v463 = vmul.f32 %v461, %v457
        %v464 = vmul.f32 %v462, %v458
        %v465 = vsub.f32 %v459, %v463
        %v466 = vsub.f32 %v460, %v464
        %v467 = vld [vmem:[#allocation2] sm:$0xff]
        %v468 = vld [vmem:[#allocation2 + $0x8] sm:$0xff]
        %v469 = vld [vmem:[%s289] sm:$0xff]
        %v470 = vld [vmem:[%s289 + $0x8] sm:$0xff]
        %v471 = vld [vmem:[%s289 + $0x10] sm:$0xff]
        %v472 = vld [vmem:[%s289 + $0x18] sm:$0xff]
        %vm473 = vcmask 523264
        %v475 = vsel %vm473, %v465, 0
        %v478 = vsel %vm473, %v466, 0
        %v481 = vsel %vm473, %v469, 0
        %v484 = vsel %vm473, %v470, 0
        %v487 = vsel %vm473, %v471, 0
        %v490 = vsel %vm473, %v472, 0
        %492 = vmatprep.subr.mxu0 0.0
        %493 = vmatpush1.xpose.msra.mxu0 %v481
        %494 = vmatprep.subr.mxu0 0.0
        %495 = vmatpush1.xpose.msra.mxu0 %v484
        %496 = vmatprep.subr.mxu0 0.0
        %497 = vmatpush1.xpose.msra.mxu0 %v487
        %498 = vmatprep.subr.mxu0 0.0
        %499 = vmatpush1.xpose.msra.mxu0 %v490
        %500 = vmatprep.subr.mxu0 0.0
        %501 = vmatpush1.xpose.msra.mxu0 0.0
        %502 = vmatprep.subr.mxu0 0.0
        %503 = vmatpush1.xpose.msra.mxu0 0.0
        %504 = vmatprep.subr.mxu0 0.0
        %505 = vmatpush1.xpose.msra.mxu0 0.0
        %506 = vmatprep.subr.mxu0 0.0
        %507 = vmatpush1.xpose.msra.mxu0 0.0
        %508 = vmatprep.subr.mxu0 0.0
        %509 = vmatpush1.xpose.msra.mxu0 0.0
        %510 = vmatprep.subr.mxu0 0.0
        %511 = vmatpush1.xpose.msra.mxu0 0.0
        %512 = vmatprep.subr.mxu0 0.0
        %513 = vmatpush1.xpose.msra.mxu0 0.0
        %514 = vmatprep.subr.mxu0 0.0
        %515 = vmatpush1.xpose.msra.mxu0 0.0
        %516 = vmatprep.subr.mxu0 0.0
        %517 = vmatpush1.xpose.msra.mxu0 0.0
        %518 = vmatprep.subr.mxu0 0.0
        %519 = vmatpush1.xpose.msra.mxu0 0.0
        %520 = vmatprep.subr.mxu0 0.0
        %521 = vmatpush1.xpose.msra.mxu0 0.0
        %522 = vmatprep.subr.mxu0 0.0
        %523 = vmatpush1.xpose.msra.mxu0 0.0
        %524 = vmatprep.subr.mxu0 0.0
        %525 = vmatpush1.xpose.msra.mxu0 0.0
        %526 = vmatprep.subr.mxu0 0.0
        %527 = vmatpush1.xpose.msra.mxu0 0.0
        %528 = vmatprep.subr.mxu0 0.0
        %529 = vmatpush1.xpose.msra.mxu0 0.0
        %530 = vmatprep.subr.mxu0 0.0
        %531 = vmatpush1.xpose.msra.mxu0 0.0
        %532 = vmatprep.subr.mxu0 0.0
        %533 = vmatpush1.xpose.msra.mxu0 0.0
        %534 = vmatprep.subr.mxu0 0.0
        %535 = vmatpush1.xpose.msra.mxu0 0.0
        %536 = vmatprep.subr.mxu0 0.0
        %537 = vmatpush1.xpose.msra.mxu0 0.0
        %538 = vmatprep.subr.mxu0 0.0
        %539 = vmatpush1.xpose.msra.mxu0 0.0
        %540 = vmatprep.subr.mxu0 0.0
        %541 = vmatpush1.xpose.msra.mxu0 0.0
        %542 = vmatprep.subr.mxu0 0.0
        %543 = vmatpush1.xpose.msra.mxu0 0.0
        %544 = vmatprep.subr.mxu0 0.0
        %545 = vmatpush1.xpose.msra.mxu0 0.0
        %546 = vmatprep.subr.mxu0 0.0
        %547 = vmatpush1.xpose.msra.mxu0 0.0
        %548 = vmatprep.subr.mxu0 0.0
        %549 = vmatpush1.xpose.msra.mxu0 0.0
        %550 = vmatprep.subr.mxu0 0.0
        %551 = vmatpush1.xpose.msra.mxu0 0.0
        %552 = vmatprep.subr.mxu0 0.0
        %553 = vmatpush1.xpose.msra.mxu0 0.0
        %554 = vmatprep.subr.mxu0 0.0
        %555 = vmatpush1.xpose.msra.mxu0 0.0
        %556 = vmatprep.mubr.f32.mxu0 0.0
        %557 = vmatmul.mubr.f32.gmra.mrb[0].mxu0 %v475
        %v558 = vpop.f32.mrb[0].mxu0
        %v559 = vadd.f32 0.0, %v558
        %v560 = vpop.f32.mrb[0].mxu0
        %561 = vmatprep.mubr.f32.mxu0 0.0
        %562 = vmatmul.mubr.f32.gmra.mrb[0].mxu0 %v478
        %v563 = vpop.f32.mrb[0].mxu0
        %v564 = vadd.f32 0.0, %v563
        %v565 = vpop.f32.mrb[0].mxu0
        %566 = vdwg.mxu0
        %v567 = vadd.f32 %v467, %v559
        %v568 = vadd.f32 %v468, %v564
        %569 = vst.msk [vmem:[#allocation2] sm:$0xff] %vm315, %v567
        %570 = vst.msk [vmem:[#allocation2 + $0x8] sm:$0xff] %vm315, %v568
        // Predicated region
        $region45: #{tpu_custom_call.1} parent=39 // pred_check
          %p571 = pneg %p291
        $region46: #{tpu_custom_call.1} parent=39 // pred_check_branch
          %573 = sbr.rel (%p571) target = $region48
        $region47: #{tpu_custom_call.1} parent=39 // pred_region
          %v574 = vld [vmem:[#allocation2] sm:$0xff]
          %v575 = vld [vmem:[#allocation2 + $0x8] sm:$0xff]
          %v576 = vld [vmem:[%s4] sm:$0x1]
          %v578 = vlaneseq
          %v579 = vshrl.u32 %v578, 7
          %v580 = vsub.s32 0, %v579
          %v581 = vrot.slane %v576, %v580
          %v583 = vadd.f32 %v574, %v581
          %v584 = vadd.f32 %v575, %v581
          %585 = vst.msk [vmem:[%s270] sm:$0xff] %vm315, %v583
          %586 = vst.msk [vmem:[%s270 + $0x8] sm:$0xff] %vm315, %v584
        $region48: #{tpu_custom_call.1} parent=39 // pred_fallthru
          _
        %s587 = sand.u32 %s164, 1
        %s588 = scalar_lea.sflag [#allocation4], %s587
        %s589 = sand.u32 %s164, 1
        %s590 = smul.addr %s589, 16
        %s591 = scalar_lea.vmem [#allocation3], %s590
        // Predicated region
        $region49: #{tpu_custom_call.1} parent=39 // pred_check
          %p592 = pneg %p174
        $region50: #{tpu_custom_call.1} parent=39 // pred_check_branch
          %594 = sbr.rel (%p592) target = $region52
        $region51: #{tpu_custom_call.1} parent=39 // pred_region
          %s595 = smul.u32 2, %s23
          %s597 = ssub.s32 256, 256
          %598 = vsyncadd %s588, %s597
          %s599 = smul.addr %s595, 128
          %s600 = scalar_lea.hbm %s5, %s599
          %s601 = sshll.u32 %s591, 4
          %s602 = int_to_ptr.vmem [resolvable:$true] %s601
          %607 = dma.vmem_to_hbm [thread:$0]  %s602, 256, %s600, %s588, 128, 128, 8
        $region52: #{tpu_custom_call.1} parent=39 // pred_fallthru
          _
      $region40: #{tpu_custom_call.1} parent=5 // pred_fallthru
        _
      %p608 = scmp.le.s32.totalorder 2, %s14
      // Predicated region
      $region53: #{tpu_custom_call.1} parent=5 // pred_check
        %p609 = pneg %p608
      $region54: #{tpu_custom_call.1} parent=5 // pred_check_branch
        %611 = sbr.rel (%p609) target = $region56
      $region55: #{tpu_custom_call.1} parent=5 // pred_region
        %s612 = ssub.s32 %s14, 2
        // Predicated region
        $region57: #{tpu_custom_call.1} parent=55 // pred_check
          %p613 = pneg %p180
        $region58: #{tpu_custom_call.1} parent=55 // pred_check_branch
          %615 = sbr.rel (%p613) target = $region60
        $region59: #{tpu_custom_call.1} parent=55 // pred_region
          %s616 = sand.u32 %s165, 1
          %s617 = scalar_lea.sflag [#allocation4], %s616
          %s618 = sand.u32 %s165, 1
          %s619 = smul.addr %s618, 16
          %s620 = scalar_lea.vmem [#allocation3], %s619
          %621 = dma.done %s617, 256
        $region60: #{tpu_custom_call.1} parent=55 // pred_fallthru
          _
      $region56: #{tpu_custom_call.1} parent=5 // pred_fallthru
        _
    $region6: #{tpu_custom_call.1} parent=1 // loop_footer
      %s18 = sadd.s32 1, %s14
    $region7: #{tpu_custom_call.1} parent=1 // loop_footer_branch
      %13 = sbr.rel target = $region3
    $region8: #{tpu_custom_call.1} parent=1 // loop_exit
      _
    %622 = vsyncpa [#allocation4], 1
    %s623 = scalar_lea.sflag [#allocation4], 1
    %624 = vsyncpa %s623, 1

</llo_original>
